<compile_context>
chip_gen: v7x
topology: tpu7x:2x2x1
jax: 0.10.0
libtpu: 0.0.40
codegen_flags: <defaults>
</compile_context>

<pallas_src>
import functools

import jax
import jax.numpy as jnp
from jax.experimental import pallas as pl
from jax.experimental.pallas import tpu as pltpu

LANE = 128           # TPU lane width
BN_EPS = 1e-5        # PyTorch BatchNorm1d default
LEAKY_SLOPE = 0.01   # PyTorch LeakyReLU default
FUSED_VMEM_BUDGET = 8 * 1024 * 1024   # use the single fused kernel below this


def _round_up(n, m):
    return ((n + m - 1) // m) * m


# --------------------------------------------------------------------------
# Fused single-invocation kernel: backbone + linear1 + masked BN stats +
# BN affine + LeakyReLU + linear2.  Whole (padded) batch resides in VMEM.
# --------------------------------------------------------------------------
def _fused_kernel(x_ref, wfe_ref, bfe_ref, w1_ref, gamma_ref, beta_ref,
                  w2_ref, b2_ref, out_ref, *, b_real):
    # Feature extractor: bf16 operands on the MXU, f32 accumulation.
    feat = jnp.dot(x_ref[...], wfe_ref[...],
                   preferred_element_type=jnp.float32) + bfe_ref[...]
    feat = jnp.maximum(feat, 0.0)                       # ReLU in f32 (v5e-safe)

    # classifier.linear1 — bias omitted: a per-channel constant is exactly
    # cancelled by the BatchNorm batch-mean subtraction that follows.
    h = jnp.dot(feat.astype(jnp.bfloat16), w1_ref[...],
                preferred_element_type=jnp.float32)     # [B_pad, H_pad] f32

    # Masked BatchNorm statistics (exclude zero-padded batch rows).
    b_pad = h.shape[0]
    row = jax.lax.broadcasted_iota(jnp.int32, (b_pad, 1), 0)
    mask = (row < b_real).astype(jnp.float32)           # [B_pad, 1]
    hm = h * mask
    inv_n = 1.0 / float(b_real)
    mean = jnp.sum(hm, axis=0, keepdims=True) * inv_n
    var = jnp.sum(hm * h, axis=0, keepdims=True) * inv_n - mean * mean
    var = jnp.maximum(var, 0.0)                         # guard f32 cancellation

    scale = gamma_ref[...] * jax.lax.rsqrt(var + BN_EPS)
    shift = beta_ref[...] - mean * scale

    # BN folded to a single affine, then LeakyReLU, all in f32.
    hn = h * scale + shift
    act = jnp.where(hn >= 0.0, hn, LEAKY_SLOPE * hn)

    # classifier.linear2 on the MXU.
    out_ref[...] = jnp.dot(act.astype(jnp.bfloat16), w2_ref[...],
                           preferred_element_type=jnp.float32) + b2_ref[...]


# --------------------------------------------------------------------------
# Tiled path, stage 1: backbone + linear1 (no bias) + masked per-tile partial
# BN sums.  h is written back in bf16 to halve the inter-stage HBM traffic.
# --------------------------------------------------------------------------
def _stage1_kernel(x_ref, wfe_ref, bfe_ref, w1_ref, h_ref, stats_ref, *, b_real):
    tb = x_ref.shape[0]

    feat = jnp.dot(x_ref[...], wfe_ref[...],
                   preferred_element_type=jnp.float32) + bfe_ref[...]
    feat = jnp.maximum(feat, 0.0)

    h = jnp.dot(feat.astype(jnp.bfloat16), w1_ref[...],
                preferred_element_type=jnp.float32)     # [TB, H_pad] f32
    h_ref[...] = h.astype(jnp.bfloat16)                 # bf16 inter-stage ferry

    # Masked partial BN statistics (exclude zero-padded batch rows).
    n_h = h.shape[1]
    row = jax.lax.broadcasted_iota(jnp.int32, (tb, 1), 0) + pl.program_id(0) * tb
    mask = (row < b_real).astype(jnp.float32)           # [TB, 1]
    hm = h * mask
    sum_h = jnp.sum(hm, axis=0, keepdims=True)          # [1, n_h]
    sum_h2 = jnp.sum(hm * h, axis=0, keepdims=True)     # [1, n_h]

    # Pack the two partial sums into rows 0 / 1 of an (8, n_h) block
    # (single full-tile store, no masked partial stores).
    rows = jax.lax.broadcasted_iota(jnp.int32, (8, n_h), 0)
    blk = jnp.where(rows == 0, jnp.broadcast_to(sum_h, (8, n_h)),
                    jnp.where(rows == 1, jnp.broadcast_to(sum_h2, (8, n_h)), 0.0))
    stats_ref[...] = blk


# --------------------------------------------------------------------------
# Tiled path, stage 2: precomputed BN scale/shift -> LeakyReLU -> linear2.
# (Global-stats reduction is hoisted into the wrapper.)
# --------------------------------------------------------------------------
def _stage2_kernel(h_ref, scale_ref, shift_ref, w2_ref, b2_ref, out_ref):
    hn = h_ref[...].astype(jnp.float32) * scale_ref[...] + shift_ref[...]
    act = jnp.where(hn >= 0.0, hn, LEAKY_SLOPE * hn)
    out_ref[...] = jnp.dot(act.astype(jnp.bfloat16), w2_ref[...],
                           preferred_element_type=jnp.float32) + b2_ref[...]


# --------------------------------------------------------------------------
# Wrapper: padding / dtype prep (plain-JAX glue) + pallas_call(s).
# --------------------------------------------------------------------------
def deepcluster_forward(x_nchw, params, *, force_tiled=False):
    (wfe, bfe, w1, b1, gamma, beta, w2, b2) = params
    del b1  # mathematically a no-op: cancelled by the BN batch-mean subtraction

    B = x_nchw.shape[0]
    in_dim, F = wfe.shape
    Hdim = w1.shape[1]            # 256
    K = w2.shape[1]               # num_clusters

    in_pad = _round_up(in_dim, LANE)
    F_pad = _round_up(F, LANE)
    H_pad = _round_up(Hdim, LANE)
    K_pad = _round_up(K, LANE)

    x_flat = x_nchw.reshape(B, -1).astype(jnp.float32)

    # Weight / bias padding (zero padding keeps the math exact: padded input
    # columns hit zero weight rows, padded feature/cluster columns come from
    # zero weight columns, padded batch rows are masked out of BN stats).
    wfe_p = jnp.zeros((in_pad, F_pad), jnp.float32).at[:in_dim, :F].set(wfe)
    wfe_p = wfe_p.astype(jnp.bfloat16)
    bfe_p = jnp.zeros((1, F_pad), jnp.float32).at[:, :F].set(bfe)
    w1_p = jnp.zeros((F_pad, H_pad), jnp.float32).at[:F, :Hdim].set(w1)
    w1_p = w1_p.astype(jnp.bfloat16)
    gamma_p = jnp.zeros((1, H_pad), jnp.float32).at[:, :Hdim].set(gamma)
    beta_p = jnp.zeros((1, H_pad), jnp.float32).at[:, :Hdim].set(beta)
    w2_p = jnp.zeros((H_pad, K_pad), jnp.float32).at[:Hdim, :K].set(w2)
    w2_p = w2_p.astype(jnp.bfloat16)
    b2_p = jnp.zeros((1, K_pad), jnp.float32).at[:, :K].set(b2)

    # ---------------- Fused path (small / medium batch) --------------------
    B_f = _round_up(max(B, 16), 16)          # bf16 sublane packing only
    fused_bytes = (B_f * (in_pad * 2 + F_pad * 4 + H_pad * 4 + K_pad * 4)
                   + in_pad * F_pad * 2 + F_pad * H_pad * 2 + H_pad * K_pad * 2
                   + 6 * H_pad * 4)
    use_fused = (not force_tiled) and (fused_bytes <= FUSED_VMEM_BUDGET)

    if use_fused:
        x_p = jnp.zeros((B_f, in_pad), jnp.float32).at[:B, :in_dim].set(x_flat)
        x_p = x_p.astype(jnp.bfloat16)

        out_pad = pl.pallas_call(
            functools.partial(_fused_kernel, b_real=B),
            out_shape=jax.ShapeDtypeStruct((B_f, K_pad), jnp.float32),
            compiler_params=pltpu.CompilerParams(
                vmem_limit_bytes=32 * 1024 * 1024),
        )(x_p, wfe_p, bfe_p, w1_p, gamma_p, beta_p, w2_p, b2_p)
        return out_pad[:B, :K]

    # ---------------- Tiled path (large batch) ------------------------------
    TB = 256 if B >= 2048 else 128           # adaptive batch tile (MXU M dim)
    B_pad = _round_up(max(B, TB), TB)
    n_tiles = B_pad // TB

    x_p = jnp.zeros((B_pad, in_pad), jnp.float32).at[:B, :in_dim].set(x_flat)
    x_p = x_p.astype(jnp.bfloat16)

    cparams = pltpu.CompilerParams(dimension_semantics=("parallel",),
                                   vmem_limit_bytes=32 * 1024 * 1024)

    # ---- stage 1: backbone + linear1 + masked partial BN sums -------------
    h_bf16, stats = pl.pallas_call(
        functools.partial(_stage1_kernel, b_real=B),
        grid=(n_tiles,),
        in_specs=[
            pl.BlockSpec((TB, in_pad), lambda i: (i, 0)),       # x tile
            pl.BlockSpec((in_pad, F_pad), lambda i: (0, 0)),    # wfe (resident)
            pl.BlockSpec((1, F_pad), lambda i: (0, 0)),         # bfe (resident)
            pl.BlockSpec((F_pad, H_pad), lambda i: (0, 0)),     # w1  (resident)
        ],
        out_specs=[
            pl.BlockSpec((TB, H_pad), lambda i: (i, 0)),        # h tile (bf16)
            pl.BlockSpec((8, H_pad), lambda i: (i, 0)),         # partial stats
        ],
        out_shape=[
            jax.ShapeDtypeStruct((B_pad, H_pad), jnp.bfloat16),
            jax.ShapeDtypeStruct((n_tiles * 8, H_pad), jnp.float32),
        ],
        compiler_params=cparams,
    )(x_p, wfe_p, bfe_p, w1_p)

    # ---- hoisted global-stats reduction + BN scale/shift (tiny, wrapper) --
    s = jnp.sum(stats.reshape(n_tiles, 8, H_pad), axis=0)       # [8, H_pad]
    inv_n = 1.0 / float(B)
    mean = s[0:1, :] * inv_n
    var = jnp.maximum(s[1:2, :] * inv_n - mean * mean, 0.0)     # biased var
    scale = gamma_p * jax.lax.rsqrt(var + BN_EPS)
    shift = beta_p - mean * scale

    # ---- stage 2: BN affine + LeakyReLU + linear2 per batch tile -----------
    out_pad = pl.pallas_call(
        _stage2_kernel,
        grid=(n_tiles,),
        in_specs=[
            pl.BlockSpec((TB, H_pad), lambda i: (i, 0)),        # h tile (bf16)
            pl.BlockSpec((1, H_pad), lambda i: (0, 0)),         # scale
            pl.BlockSpec((1, H_pad), lambda i: (0, 0)),         # shift
            pl.BlockSpec((H_pad, K_pad), lambda i: (0, 0)),     # w2 (resident)
            pl.BlockSpec((1, K_pad), lambda i: (0, 0)),         # b2
        ],
        out_specs=pl.BlockSpec((TB, K_pad), lambda i: (i, 0)),
        out_shape=jax.ShapeDtypeStruct((B_pad, K_pad), jnp.float32),
        compiler_params=cparams,
    )(h_bf16, scale, shift, w2_p, b2_p)

    return out_pad[:B, :K]


# --------------------------------------------------------------------------
# Parameters + pure-JAX reference (mirrors the bf16 matmul casts).
# --------------------------------------------------------------------------
def make_params(key, in_dim, feature_size, hidden, num_clusters):
    ks = jax.random.split(key, 6)
    wfe = jax.random.normal(ks[0], (in_dim, feature_size), jnp.float32) * 0.02
    bfe = jax.random.normal(ks[1], (1, feature_size), jnp.float32) * 0.01
    w1 = jax.random.normal(ks[2], (feature_size, hidden), jnp.float32) * 0.05
    b1 = jax.random.normal(ks[3], (1, hidden), jnp.float32) * 0.01
    gamma = jnp.ones((1, hidden), jnp.float32)
    beta = jnp.zeros((1, hidden), jnp.float32)
    w2 = jax.random.normal(ks[4], (hidden, num_clusters), jnp.float32) * 0.01
    b2 = jnp.zeros((1, num_clusters), jnp.float32)
    return (wfe, bfe, w1, b1, gamma, beta, w2, b2)


def reference_forward(x_nchw, params):
    (wfe, bfe, w1, b1, gamma, beta, w2, b2) = params
    B = x_nchw.shape[0]
    x = x_nchw.reshape(B, -1).astype(jnp.float32)
    feat = jnp.maximum(
        jnp.dot(x.astype(jnp.bfloat16), wfe.astype(jnp.bfloat16),
                preferred_element_type=jnp.float32) + bfe, 0.0)
    h = jnp.dot(feat.astype(jnp.bfloat16), w1.astype(jnp.bfloat16),
                preferred_element_type=jnp.float32) + b1
    mean = jnp.mean(h, axis=0, keepdims=True)
    var = jnp.mean((h - mean) ** 2, axis=0, keepdims=True)   # biased, training mode
    hn = (h - mean) * jax.lax.rsqrt(var + BN_EPS) * gamma + beta
    hn = jnp.where(hn >= 0.0, hn, LEAKY_SLOPE * hn)
    return jnp.dot(hn.astype(jnp.bfloat16), w2.astype(jnp.bfloat16),
                   preferred_element_type=jnp.float32) + b2


if __name__ == "__main__":
    key = jax.random.PRNGKey(0)
    k_x, k_x2, k_p = jax.random.split(key, 3)

    # Small shapes consistent with the module's forward.
    B, C, H, W = 8, 4, 16, 16
    feature_size = 64
    hidden = 256          # classifier.linear1 output width (fixed in module)
    num_clusters = 16

    x = jax.random.normal(k_x, (B, C, H, W), jnp.float32)
    params = make_params(k_p, C * H * W, feature_size, hidden, num_clusters)

    # --- fused path (default for small batch) ---
    out = deepcluster_forward(x, params)
    out = jax.block_until_ready(out)
    ref = reference_forward(x, params)
    assert out.shape == (B, num_clusters)
    assert jnp.allclose(out, ref, atol=1e-2, rtol=1e-2), (
        float(jnp.max(jnp.abs(out - ref))))

    # --- tiled path (batch-tiled grid, exercised explicitly) ---
    B2 = 200
    x2 = jax.random.normal(k_x2, (B2, C, H, W), jnp.float32)
    out2 = deepcluster_forward(x2, params, force_tiled=True)
    out2 = jax.block_until_ready(out2)
    ref2 = reference_forward(x2, params)
    assert out2.shape == (B2, num_clusters)
    assert jnp.allclose(out2, ref2, atol=1e-2, rtol=1e-2), (
        float(jnp.max(jnp.abs(out2 - ref2))))

    print("KERNEL_OK")
</pallas_src>

<mosaic_0001>
module attributes {stable_mosaic.version = 11 : i64} {
  func.func @_fused_kernel(%arg0: memref<16x1024xbf16, #tpu.memory_space<vmem>>, %arg1: memref<1024x128xbf16, #tpu.memory_space<vmem>>, %arg2: memref<1x128xf32, #tpu.memory_space<vmem>>, %arg3: memref<128x256xbf16, #tpu.memory_space<vmem>>, %arg4: memref<1x256xf32, #tpu.memory_space<vmem>>, %arg5: memref<1x256xf32, #tpu.memory_space<vmem>>, %arg6: memref<256x128xbf16, #tpu.memory_space<vmem>>, %arg7: memref<1x128xf32, #tpu.memory_space<vmem>>, %arg8: memref<16x128xf32, #tpu.memory_space<vmem>>) attributes {dimension_semantics = [], scalar_prefetch = 0 : i64, scratch_operands = 0 : i64, tpu.core_type = #tpu.core_type<tc>} {
    %c0 = arith.constant 0 : index
    %c0_0 = arith.constant 0 : index
    %0 = vector.load %arg0[%c0, %c0_0] : memref<16x1024xbf16, #tpu.memory_space<vmem>>, vector<16x1024xbf16>
    %c0_1 = arith.constant 0 : index
    %c0_2 = arith.constant 0 : index
    %1 = vector.load %arg1[%c0_1, %c0_2] : memref<1024x128xbf16, #tpu.memory_space<vmem>>, vector<1024x128xbf16>
    %cst = arith.constant dense<0.000000e+00> : vector<16x128xf32>
    %2 = tpu.matmul %0, %1, %cst {dimension_numbers = #tpu.dot_dimension_numbers<[1], [0], [0], [1], [0, 0, 1, 1], [], []>} : vector<16x1024xbf16>, vector<1024x128xbf16>, vector<16x128xf32> -> vector<16x128xf32>
    %c0_3 = arith.constant 0 : index
    %c0_4 = arith.constant 0 : index
    %3 = vector.load %arg2[%c0_3, %c0_4] : memref<1x128xf32, #tpu.memory_space<vmem>>, vector<1x128xf32>
    %4 = vector.broadcast %3 : vector<1x128xf32> to vector<16x128xf32>
    %5 = arith.addf %2, %4 : vector<16x128xf32>
    %cst_5 = arith.constant 0.000000e+00 : f32
    %6 = vector.broadcast %cst_5 : f32 to vector<16x128xf32>
    %7 = arith.maximumf %5, %6 : vector<16x128xf32>
    %8 = arith.truncf %7 : vector<16x128xf32> to vector<16x128xbf16>
    %c0_6 = arith.constant 0 : index
    %c0_7 = arith.constant 0 : index
    %9 = vector.load %arg3[%c0_6, %c0_7] : memref<128x256xbf16, #tpu.memory_space<vmem>>, vector<128x256xbf16>
    %cst_8 = arith.constant dense<0.000000e+00> : vector<16x256xf32>
    %10 = tpu.matmul %8, %9, %cst_8 {dimension_numbers = #tpu.dot_dimension_numbers<[1], [0], [0], [1], [0, 0, 1, 1], [], []>} : vector<16x128xbf16>, vector<128x256xbf16>, vector<16x256xf32> -> vector<16x256xf32>
    %11 = tpu.iota {dimensions = array<i32: 0>} : vector<16x1xi32>
    %c8_i32 = arith.constant 8 : i32
    %12 = vector.broadcast %c8_i32 : i32 to vector<16x1xi32>
    %13 = arith.cmpi slt, %11, %12 : vector<16x1xi32>
    %14 = arith.extui %13 : vector<16x1xi1> to vector<16x1xi32>
    %15 = arith.sitofp %14 : vector<16x1xi32> to vector<16x1xf32>
    %16 = vector.broadcast %15 : vector<16x1xf32> to vector<16x256xf32>
    %17 = arith.mulf %10, %16 : vector<16x256xf32>
    %cst_9 = arith.constant dense<0.000000e+00> : vector<256xf32>
    %18 = vector.multi_reduction <add>, %17, %cst_9 [0] : vector<16x256xf32> to vector<256xf32>
    %19 = vector.shape_cast %18 : vector<256xf32> to vector<1x256xf32>
    %cst_10 = arith.constant 1.250000e-01 : f32
    %20 = vector.broadcast %cst_10 : f32 to vector<1x256xf32>
    %21 = arith.mulf %19, %20 : vector<1x256xf32>
    %22 = arith.mulf %17, %10 : vector<16x256xf32>
    %cst_11 = arith.constant dense<0.000000e+00> : vector<256xf32>
    %23 = vector.multi_reduction <add>, %22, %cst_11 [0] : vector<16x256xf32> to vector<256xf32>
    %24 = vector.shape_cast %23 : vector<256xf32> to vector<1x256xf32>
    %cst_12 = arith.constant 1.250000e-01 : f32
    %25 = vector.broadcast %cst_12 : f32 to vector<1x256xf32>
    %26 = arith.mulf %24, %25 : vector<1x256xf32>
    %27 = arith.mulf %21, %21 : vector<1x256xf32>
    %28 = arith.subf %26, %27 : vector<1x256xf32>
    %cst_13 = arith.constant 0.000000e+00 : f32
    %29 = vector.broadcast %cst_13 : f32 to vector<1x256xf32>
    %30 = arith.maximumf %28, %29 : vector<1x256xf32>
    %c0_14 = arith.constant 0 : index
    %c0_15 = arith.constant 0 : index
    %31 = vector.load %arg4[%c0_14, %c0_15] : memref<1x256xf32, #tpu.memory_space<vmem>>, vector<1x256xf32>
    %cst_16 = arith.constant 9.99999974E-6 : f32
    %32 = vector.broadcast %cst_16 : f32 to vector<1x256xf32>
    %33 = arith.addf %30, %32 : vector<1x256xf32>
    %34 = math.rsqrt %33 : vector<1x256xf32>
    %35 = arith.mulf %31, %34 : vector<1x256xf32>
    %c0_17 = arith.constant 0 : index
    %c0_18 = arith.constant 0 : index
    %36 = vector.load %arg5[%c0_17, %c0_18] : memref<1x256xf32, #tpu.memory_space<vmem>>, vector<1x256xf32>
    %37 = arith.mulf %21, %35 : vector<1x256xf32>
    %38 = arith.subf %36, %37 : vector<1x256xf32>
    %39 = vector.broadcast %35 : vector<1x256xf32> to vector<16x256xf32>
    %40 = arith.mulf %10, %39 : vector<16x256xf32>
    %41 = vector.broadcast %38 : vector<1x256xf32> to vector<16x256xf32>
    %42 = arith.addf %40, %41 : vector<16x256xf32>
    %cst_19 = arith.constant 0.000000e+00 : f32
    %43 = vector.broadcast %cst_19 : f32 to vector<16x256xf32>
    %44 = arith.cmpf oge, %42, %43 : vector<16x256xf32>
    %cst_20 = arith.constant 0.00999999977 : f32
    %45 = vector.broadcast %cst_20 : f32 to vector<16x256xf32>
    %46 = arith.mulf %45, %42 : vector<16x256xf32>
    %47 = arith.select %44, %42, %46 : vector<16x256xi1>, vector<16x256xf32>
    %48 = arith.truncf %47 : vector<16x256xf32> to vector<16x256xbf16>
    %c0_21 = arith.constant 0 : index
    %c0_22 = arith.constant 0 : index
    %49 = vector.load %arg6[%c0_21, %c0_22] : memref<256x128xbf16, #tpu.memory_space<vmem>>, vector<256x128xbf16>
    %cst_23 = arith.constant dense<0.000000e+00> : vector<16x128xf32>
    %50 = tpu.matmul %48, %49, %cst_23 {dimension_numbers = #tpu.dot_dimension_numbers<[1], [0], [0], [1], [0, 0, 1, 1], [], []>} : vector<16x256xbf16>, vector<256x128xbf16>, vector<16x128xf32> -> vector<16x128xf32>
    %c0_24 = arith.constant 0 : index
    %c0_25 = arith.constant 0 : index
    %51 = vector.load %arg7[%c0_24, %c0_25] : memref<1x128xf32, #tpu.memory_space<vmem>>, vector<1x128xf32>
    %52 = vector.broadcast %51 : vector<1x128xf32> to vector<16x128xf32>
    %53 = arith.addf %50, %52 : vector<16x128xf32>
    %c0_26 = arith.constant 0 : index
    %c0_27 = arith.constant 0 : index
    %54 = vector.load %arg8[%c0_26, %c0_27] : memref<16x128xf32, #tpu.memory_space<vmem>>, vector<16x128xf32>
    tpu.vector_store %arg8[%c0_26, %c0_27], %53 {strides = array<i32>} : memref<16x128xf32, #tpu.memory_space<vmem>>, vector<16x128xf32>,
    return
  }
}

</mosaic_0001>

<llo_original>
// kernel: tpu_custom_call.1
$region0: #{tpu_custom_call.1}
  #allocation0 [shape = 'u32[]', space=smem, size = 0x4, offset = 0x4, fixed_abs, tag = 'smem constant byte address 0x4 - core index']
  #allocation1 [shape = 'u32[144,128]{1,0:T(1,128)}', space=vmem, size = 0x12000, scoped, tag = 'internal scratch']
  %s0 = inlined_call_operand.hbm [shape: bf16[16,1024], index: 0, kind: input, shape index: {}]
  %s1 = inlined_call_operand.hbm [shape: bf16[1024,128], index: 1, kind: input, shape index: {}]
  %s2 = inlined_call_operand.vmem [shape: f32[1,128], index: 2, kind: input, shape index: {}]
  %s3 = inlined_call_operand.hbm [shape: bf16[128,256], index: 3, kind: input, shape index: {}]
  %s4 = inlined_call_operand.vmem [shape: f32[1,256], index: 4, kind: input, shape index: {}]
  %s5 = inlined_call_operand.vmem [shape: f32[1,256], index: 5, kind: input, shape index: {}]
  %s6 = inlined_call_operand.hbm [shape: bf16[256,128], index: 6, kind: input, shape index: {}]
  %s7 = inlined_call_operand.vmem [shape: f32[1,128], index: 7, kind: input, shape index: {}]
  %s8 = inlined_call_operand.hbm [shape: f32[16,128], index: 8, kind: output, shape index: {}]
  %s9 = sld [smem:[#allocation0]]
  $region58: #{tpu_custom_call.1} parent=0
    _
  %s11 = ssub.s32 1, %s9
  %s12 = scalar_select 0, %s11, %s9
  $region1: #{tpu_custom_call.1} parent=0
    #allocation2 [shape = 'u8[32768]{0}', space=vmem, size = 0x8000, scoped, tag = 'input window, operand 0, single buffered']
    #allocation3 [shape = 's32[1]{0}', space=sflag, size = 0x4, scoped, tag = 'scoped memory for tpu_custom_call.1']
    #allocation4 [shape = 's32[1]{0}', space=sflag, size = 0x4, scoped, tag = 'scoped memory for tpu_custom_call.1']
    #allocation5 [shape = 'u8[262144]{0}', space=vmem, size = 0x40000, scoped, tag = 'input window, operand 1, single buffered']
    #allocation6 [shape = 's32[1]{0}', space=sflag, size = 0x4, scoped, tag = 'scoped memory for tpu_custom_call.1']
    #allocation7 [shape = 'u8[65536]{0}', space=vmem, size = 0x10000, scoped, tag = 'input window, operand 3, single buffered']
    #allocation8 [shape = 'u8[65536]{0}', space=vmem, size = 0x10000, scoped, tag = 'input window, operand 6, single buffered']
    #allocation9 [shape = 's32[1]{0}', space=sflag, size = 0x4, scoped, tag = 'scoped memory for tpu_custom_call.1']
    #allocation10 [shape = 'u8[8192]{0}', space=vmem, size = 0x2000, scoped, tag = 'output window, operand 0, single buffered']
    %13 = vsyncpa [#allocation3], 0
    %14 = vsyncpa [#allocation6], 0
    %15 = vsyncpa [#allocation9], 0
    %16 = vsyncpa [#allocation4], 0
    // Predicated region
    $region2: #{tpu_custom_call.1} parent=1 // pred_check
      _
    $region3: #{tpu_custom_call.1} parent=1 // pred_check_branch
      %18 = sbr.rel (0) target = $region5
    $region4: #{tpu_custom_call.1} parent=1 // pred_region
      %s20 = ssub.s32 1024, 1024
      %21 = vsyncadd [#allocation3], %s20
      %s22 = sshll.u32 [#allocation2], 4
      %s23 = int_to_ptr.vmem [resolvable:$true] %s22
      %28 = dma.hbm_to_vmem [thread:$0]  %s0, 1024, %s23, [#allocation3], 512, 512, 32
    $region5: #{tpu_custom_call.1} parent=1 // pred_fallthru
      _
    // Predicated region
    $region6: #{tpu_custom_call.1} parent=1 // pred_check
      _
    $region7: #{tpu_custom_call.1} parent=1 // pred_check_branch
      %30 = sbr.rel (0) target = $region9
    $region8: #{tpu_custom_call.1} parent=1 // pred_region
      %s32 = ssub.s32 8192, 8192
      %33 = vsyncadd [#allocation6], %s32
      %s34 = sshll.u32 [#allocation5], 4
      %s35 = int_to_ptr.vmem [resolvable:$true] %s34
      %40 = dma.hbm_to_vmem [thread:$0]  %s1, 8192, %s35, [#allocation6], 64, 64, 4
    $region9: #{tpu_custom_call.1} parent=1 // pred_fallthru
      _
    // Predicated region
    $region10: #{tpu_custom_call.1} parent=1 // pred_check
      _
    $region11: #{tpu_custom_call.1} parent=1 // pred_check_branch
      %42 = sbr.rel (0) target = $region13
    $region12: #{tpu_custom_call.1} parent=1 // pred_region
      _
    $region13: #{tpu_custom_call.1} parent=1 // pred_fallthru
      _
    // Predicated region
    $region14: #{tpu_custom_call.1} parent=1 // pred_check
      _
    $region15: #{tpu_custom_call.1} parent=1 // pred_check_branch
      %44 = sbr.rel (0) target = $region17
    $region16: #{tpu_custom_call.1} parent=1 // pred_region
      %s46 = ssub.s32 2048, 2048
      %47 = vsyncadd [#allocation6], %s46
      %s48 = sshll.u32 [#allocation7], 4
      %s49 = int_to_ptr.vmem [resolvable:$true] %s48
      %54 = dma.hbm_to_vmem [thread:$0]  %s3, 2048, %s49, [#allocation6], 128, 128, 8
    $region17: #{tpu_custom_call.1} parent=1 // pred_fallthru
      _
    // Predicated region
    $region18: #{tpu_custom_call.1} parent=1 // pred_check
      _
    $region19: #{tpu_custom_call.1} parent=1 // pred_check_branch
      %56 = sbr.rel (0) target = $region21
    $region20: #{tpu_custom_call.1} parent=1 // pred_region
      _
    $region21: #{tpu_custom_call.1} parent=1 // pred_fallthru
      _
    // Predicated region
    $region22: #{tpu_custom_call.1} parent=1 // pred_check
      _
    $region23: #{tpu_custom_call.1} parent=1 // pred_check_branch
      %58 = sbr.rel (0) target = $region25
    $region24: #{tpu_custom_call.1} parent=1 // pred_region
      _
    $region25: #{tpu_custom_call.1} parent=1 // pred_fallthru
      _
    // Predicated region
    $region26: #{tpu_custom_call.1} parent=1 // pred_check
      _
    $region27: #{tpu_custom_call.1} parent=1 // pred_check_branch
      %60 = sbr.rel (0) target = $region29
    $region28: #{tpu_custom_call.1} parent=1 // pred_region
      %s62 = ssub.s32 2048, 2048
      %63 = vsyncadd [#allocation9], %s62
      %s64 = sshll.u32 [#allocation8], 4
      %s65 = int_to_ptr.vmem [resolvable:$true] %s64
      %70 = dma.hbm_to_vmem [thread:$0]  %s6, 2048, %s65, [#allocation9], 64, 64, 4
    $region29: #{tpu_custom_call.1} parent=1 // pred_fallthru
      _
    // Predicated region
    $region30: #{tpu_custom_call.1} parent=1 // pred_check
      _
    $region31: #{tpu_custom_call.1} parent=1 // pred_check_branch
      %72 = sbr.rel (0) target = $region33
    $region32: #{tpu_custom_call.1} parent=1 // pred_region
      _
    $region33: #{tpu_custom_call.1} parent=1 // pred_fallthru
      _
    // Predicated region
    $region34: #{tpu_custom_call.1} parent=1 // pred_check
      _
    $region35: #{tpu_custom_call.1} parent=1 // pred_check_branch
      %74 = sbr.rel (0) target = $region37
    $region36: #{tpu_custom_call.1} parent=1 // pred_region
      %75 = dma.done [#allocation3], 1024
    $region37: #{tpu_custom_call.1} parent=1 // pred_fallthru
      _
    // Predicated region
    $region38: #{tpu_custom_call.1} parent=1 // pred_check
      _
    $region39: #{tpu_custom_call.1} parent=1 // pred_check_branch
      %77 = sbr.rel (0) target = $region41
    $region40: #{tpu_custom_call.1} parent=1 // pred_region
      %78 = dma.done [#allocation6], 8192
    $region41: #{tpu_custom_call.1} parent=1 // pred_fallthru
      _
    // Predicated region
    $region42: #{tpu_custom_call.1} parent=1 // pred_check
      _
    $region43: #{tpu_custom_call.1} parent=1 // pred_check_branch
      %80 = sbr.rel (0) target = $region45
    $region44: #{tpu_custom_call.1} parent=1 // pred_region
      %81 = dma.done [#allocation6], 2048
    $region45: #{tpu_custom_call.1} parent=1 // pred_fallthru
      _
    // Predicated region
    $region46: #{tpu_custom_call.1} parent=1 // pred_check
      _
    $region47: #{tpu_custom_call.1} parent=1 // pred_check_branch
      %83 = sbr.rel (0) target = $region49
    $region48: #{tpu_custom_call.1} parent=1 // pred_region
      %84 = dma.done [#allocation9], 2048
    $region49: #{tpu_custom_call.1} parent=1 // pred_fallthru
      _
    %v86 = vld [vmem:[#allocation2] sm:$0xff]
    %v87 = vld [vmem:[#allocation2 + $0x8] sm:$0xff]
    %v88 = vld [vmem:[#allocation2 + $0x10] sm:$0xff]
    %v89 = vld [vmem:[#allocation2 + $0x18] sm:$0xff]
    %v90 = vld [vmem:[#allocation2 + $0x20] sm:$0xff]
    %v91 = vld [vmem:[#allocation2 + $0x28] sm:$0xff]
    %v92 = vld [vmem:[#allocation2 + $0x30] sm:$0xff]
    %v93 = vld [vmem:[#allocation2 + $0x38] sm:$0xff]
    %v94 = vld [vmem:[#allocation5] sm:$0xf]
    %v95 = vld [vmem:[#allocation5 + $0x4] sm:$0xf]
    %v96 = vld [vmem:[#allocation5 + $0x8] sm:$0xf]
    %v97 = vld [vmem:[#allocation5 + $0xc] sm:$0xf]
    %v98 = vld [vmem:[#allocation5 + $0x10] sm:$0xf]
    %v99 = vld [vmem:[#allocation5 + $0x14] sm:$0xf]
    %v100 = vld [vmem:[#allocation5 + $0x18] sm:$0xf]
    %v101 = vld [vmem:[#allocation5 + $0x1c] sm:$0xf]
    %v102 = vld [vmem:[#allocation5 + $0x20] sm:$0xf]
    %v103 = vld [vmem:[#allocation5 + $0x24] sm:$0xf]
    %v104 = vld [vmem:[#allocation5 + $0x28] sm:$0xf]
    %v105 = vld [vmem:[#allocation5 + $0x2c] sm:$0xf]
    %v106 = vld [vmem:[#allocation5 + $0x30] sm:$0xf]
    %v107 = vld [vmem:[#allocation5 + $0x34] sm:$0xf]
    %v108 = vld [vmem:[#allocation5 + $0x38] sm:$0xf]
    %v109 = vld [vmem:[#allocation5 + $0x3c] sm:$0xf]
    %v110 = vld [vmem:[#allocation5 + $0x40] sm:$0xf]
    %v111 = vld [vmem:[#allocation5 + $0x44] sm:$0xf]
    %v112 = vld [vmem:[#allocation5 + $0x48] sm:$0xf]
    %v113 = vld [vmem:[#allocation5 + $0x4c] sm:$0xf]
    %v114 = vld [vmem:[#allocation5 + $0x50] sm:$0xf]
    %v115 = vld [vmem:[#allocation5 + $0x54] sm:$0xf]
    %v116 = vld [vmem:[#allocation5 + $0x58] sm:$0xf]
    %v117 = vld [vmem:[#allocation5 + $0x5c] sm:$0xf]
    %v118 = vld [vmem:[#allocation5 + $0x60] sm:$0xf]
    %v119 = vld [vmem:[#allocation5 + $0x64] sm:$0xf]
    %v120 = vld [vmem:[#allocation5 + $0x68] sm:$0xf]
    %v121 = vld [vmem:[#allocation5 + $0x6c] sm:$0xf]
    %v122 = vld [vmem:[#allocation5 + $0x70] sm:$0xf]
    %v123 = vld [vmem:[#allocation5 + $0x74] sm:$0xf]
    %v124 = vld [vmem:[#allocation5 + $0x78] sm:$0xf]
    %v125 = vld [vmem:[#allocation5 + $0x7c] sm:$0xf]
    %v126 = vld [vmem:[#allocation5 + $0x80] sm:$0xf]
    %v127 = vld [vmem:[#allocation5 + $0x84] sm:$0xf]
    %v128 = vld [vmem:[#allocation5 + $0x88] sm:$0xf]
    %v129 = vld [vmem:[#allocation5 + $0x8c] sm:$0xf]
    %v130 = vld [vmem:[#allocation5 + $0x90] sm:$0xf]
    %v131 = vld [vmem:[#allocation5 + $0x94] sm:$0xf]
    %v132 = vld [vmem:[#allocation5 + $0x98] sm:$0xf]
    %v133 = vld [vmem:[#allocation5 + $0x9c] sm:$0xf]
    %v134 = vld [vmem:[#allocation5 + $0xa0] sm:$0xf]
    %v135 = vld [vmem:[#allocation5 + $0xa4] sm:$0xf]
    %v136 = vld [vmem:[#allocation5 + $0xa8] sm:$0xf]
    %v137 = vld [vmem:[#allocation5 + $0xac] sm:$0xf]
    %v138 = vld [vmem:[#allocation5 + $0xb0] sm:$0xf]
    %v139 = vld [vmem:[#allocation5 + $0xb4] sm:$0xf]
    %v140 = vld [vmem:[#allocation5 + $0xb8] sm:$0xf]
    %v141 = vld [vmem:[#allocation5 + $0xbc] sm:$0xf]
    %v142 = vld [vmem:[#allocation5 + $0xc0] sm:$0xf]
    %v143 = vld [vmem:[#allocation5 + $0xc4] sm:$0xf]
    %v144 = vld [vmem:[#allocation5 + $0xc8] sm:$0xf]
    %v145 = vld [vmem:[#allocation5 + $0xcc] sm:$0xf]
    %v146 = vld [vmem:[#allocation5 + $0xd0] sm:$0xf]
    %v147 = vld [vmem:[#allocation5 + $0xd4] sm:$0xf]
    %v148 = vld [vmem:[#allocation5 + $0xd8] sm:$0xf]
    %v149 = vld [vmem:[#allocation5 + $0xdc] sm:$0xf]
    %v150 = vld [vmem:[#allocation5 + $0xe0] sm:$0xf]
    %v151 = vld [vmem:[#allocation5 + $0xe4] sm:$0xf]
    %v152 = vld [vmem:[#allocation5 + $0xe8] sm:$0xf]
    %v153 = vld [vmem:[#allocation5 + $0xec] sm:$0xf]
    %v154 = vld [vmem:[#allocation5 + $0xf0] sm:$0xf]
    %v155 = vld [vmem:[#allocation5 + $0xf4] sm:$0xf]
    %v156 = vld [vmem:[#allocation5 + $0xf8] sm:$0xf]
    %v157 = vld [vmem:[#allocation5 + $0xfc] sm:$0xf]
    %v158 = vld [vmem:[#allocation5 + $0x100] sm:$0xf]
    %v159 = vld [vmem:[#allocation5 + $0x104] sm:$0xf]
    %v160 = vld [vmem:[#allocation5 + $0x108] sm:$0xf]
    %v161 = vld [vmem:[#allocation5 + $0x10c] sm:$0xf]
    %v162 = vld [vmem:[#allocation5 + $0x110] sm:$0xf]
    %v163 = vld [vmem:[#allocation5 + $0x114] sm:$0xf]
    %v164 = vld [vmem:[#allocation5 + $0x118] sm:$0xf]
    %v165 = vld [vmem:[#allocation5 + $0x11c] sm:$0xf]
    %v166 = vld [vmem:[#allocation5 + $0x120] sm:$0xf]
    %v167 = vld [vmem:[#allocation5 + $0x124] sm:$0xf]
    %v168 = vld [vmem:[#allocation5 + $0x128] sm:$0xf]
    %v169 = vld [vmem:[#allocation5 + $0x12c] sm:$0xf]
    %v170 = vld [vmem:[#allocation5 + $0x130] sm:$0xf]
    %v171 = vld [vmem:[#allocation5 + $0x134] sm:$0xf]
    %v172 = vld [vmem:[#allocation5 + $0x138] sm:$0xf]
    %v173 = vld [vmem:[#allocation5 + $0x13c] sm:$0xf]
    %v174 = vld [vmem:[#allocation5 + $0x140] sm:$0xf]
    %v175 = vld [vmem:[#allocation5 + $0x144] sm:$0xf]
    %v176 = vld [vmem:[#allocation5 + $0x148] sm:$0xf]
    %v177 = vld [vmem:[#allocation5 + $0x14c] sm:$0xf]
    %v178 = vld [vmem:[#allocation5 + $0x150] sm:$0xf]
    %v179 = vld [vmem:[#allocation5 + $0x154] sm:$0xf]
    %v180 = vld [vmem:[#allocation5 + $0x158] sm:$0xf]
    %v181 = vld [vmem:[#allocation5 + $0x15c] sm:$0xf]
    %v182 = vld [vmem:[#allocation5 + $0x160] sm:$0xf]
    %v183 = vld [vmem:[#allocation5 + $0x164] sm:$0xf]
    %v184 = vld [vmem:[#allocation5 + $0x168] sm:$0xf]
    %v185 = vld [vmem:[#allocation5 + $0x16c] sm:$0xf]
    %v186 = vld [vmem:[#allocation5 + $0x170] sm:$0xf]
    %v187 = vld [vmem:[#allocation5 + $0x174] sm:$0xf]
    %v188 = vld [vmem:[#allocation5 + $0x178] sm:$0xf]
    %v189 = vld [vmem:[#allocation5 + $0x17c] sm:$0xf]
    %v190 = vld [vmem:[#allocation5 + $0x180] sm:$0xf]
    %v191 = vld [vmem:[#allocation5 + $0x184] sm:$0xf]
    %v192 = vld [vmem:[#allocation5 + $0x188] sm:$0xf]
    %v193 = vld [vmem:[#allocation5 + $0x18c] sm:$0xf]
    %v194 = vld [vmem:[#allocation5 + $0x190] sm:$0xf]
    %v195 = vld [vmem:[#allocation5 + $0x194] sm:$0xf]
    %v196 = vld [vmem:[#allocation5 + $0x198] sm:$0xf]
    %v197 = vld [vmem:[#allocation5 + $0x19c] sm:$0xf]
    %v198 = vld [vmem:[#allocation5 + $0x1a0] sm:$0xf]
    %v199 = vld [vmem:[#allocation5 + $0x1a4] sm:$0xf]
    %v200 = vld [vmem:[#allocation5 + $0x1a8] sm:$0xf]
    %v201 = vld [vmem:[#allocation5 + $0x1ac] sm:$0xf]
    %v202 = vld [vmem:[#allocation5 + $0x1b0] sm:$0xf]
    %v203 = vld [vmem:[#allocation5 + $0x1b4] sm:$0xf]
    %v204 = vld [vmem:[#allocation5 + $0x1b8] sm:$0xf]
    %v205 = vld [vmem:[#allocation5 + $0x1bc] sm:$0xf]
    %v206 = vld [vmem:[#allocation5 + $0x1c0] sm:$0xf]
    %v207 = vld [vmem:[#allocation5 + $0x1c4] sm:$0xf]
    %v208 = vld [vmem:[#allocation5 + $0x1c8] sm:$0xf]
    %v209 = vld [vmem:[#allocation5 + $0x1cc] sm:$0xf]
    %v210 = vld [vmem:[#allocation5 + $0x1d0] sm:$0xf]
    %v211 = vld [vmem:[#allocation5 + $0x1d4] sm:$0xf]
    %v212 = vld [vmem:[#allocation5 + $0x1d8] sm:$0xf]
    %v213 = vld [vmem:[#allocation5 + $0x1dc] sm:$0xf]
    %v214 = vld [vmem:[#allocation5 + $0x1e0] sm:$0xf]
    %v215 = vld [vmem:[#allocation5 + $0x1e4] sm:$0xf]
    %v216 = vld [vmem:[#allocation5 + $0x1e8] sm:$0xf]
    %v217 = vld [vmem:[#allocation5 + $0x1ec] sm:$0xf]
    %v218 = vld [vmem:[#allocation5 + $0x1f0] sm:$0xf]
    %v219 = vld [vmem:[#allocation5 + $0x1f4] sm:$0xf]
    %v220 = vld [vmem:[#allocation5 + $0x1f8] sm:$0xf]
    %v221 = vld [vmem:[#allocation5 + $0x1fc] sm:$0xf]
    %v222 = vld [vmem:[%s2] sm:$0x1]
    %v224 = vlaneseq
    %v225 = vshrl.u32 %v224, 7
    %v226 = vsub.s32 0, %v225
    %v227 = vrot.slane %v222, %v226
    %v237 = vunpack.c.l.b16 %v86
    %v238 = vunpack.c.h.b16 %v86
    %v239 = vunpack.c.l.b16 %v87
    %v240 = vunpack.c.h.b16 %v87
    %v241 = vunpack.c.l.b16 %v88
    %v242 = vunpack.c.h.b16 %v88
    %v243 = vunpack.c.l.b16 %v89
    %v244 = vunpack.c.h.b16 %v89
    %v245 = vunpack.c.l.b16 %v90
    %v246 = vunpack.c.h.b16 %v90
    %v247 = vunpack.c.l.b16 %v91
    %v248 = vunpack.c.h.b16 %v91
    %v249 = vunpack.c.l.b16 %v92
    %v250 = vunpack.c.h.b16 %v92
    %v251 = vunpack.c.l.b16 %v93
    %v252 = vunpack.c.h.b16 %v93
    %v253 = vpack.c.b16 %v245, %v237
    %v254 = vpack.c.b16 %v246, %v238
    %v255 = vpack.c.b16 %v247, %v239
    %v256 = vpack.c.b16 %v248, %v240
    %v257 = vpack.c.b16 %v249, %v241
    %v258 = vpack.c.b16 %v250, %v242
    %v259 = vpack.c.b16 %v251, %v243
    %v260 = vpack.c.b16 %v252, %v244
    %v397 = vunpack.c.l.b16 %v94
    %v398 = vunpack.c.l.b16 %v95
    %v399 = vunpack.c.l.b16 %v96
    %v400 = vunpack.c.l.b16 %v97
    %v401 = vunpack.c.l.b16 %v98
    %v402 = vunpack.c.l.b16 %v99
    %v403 = vunpack.c.l.b16 %v100
    %v404 = vunpack.c.l.b16 %v101
    %v405 = vunpack.c.l.b16 %v102
    %v406 = vunpack.c.l.b16 %v103
    %v407 = vunpack.c.l.b16 %v104
    %v408 = vunpack.c.l.b16 %v105
    %v409 = vunpack.c.l.b16 %v106
    %v410 = vunpack.c.l.b16 %v107
    %v411 = vunpack.c.l.b16 %v108
    %v412 = vunpack.c.l.b16 %v109
    %v413 = vunpack.c.l.b16 %v110
    %v414 = vunpack.c.l.b16 %v111
    %v415 = vunpack.c.l.b16 %v112
    %v416 = vunpack.c.l.b16 %v113
    %v417 = vunpack.c.l.b16 %v114
    %v418 = vunpack.c.l.b16 %v115
    %v419 = vunpack.c.l.b16 %v116
    %v420 = vunpack.c.l.b16 %v117
    %v421 = vunpack.c.l.b16 %v118
    %v422 = vunpack.c.l.b16 %v119
    %v423 = vunpack.c.l.b16 %v120
    %v424 = vunpack.c.l.b16 %v121
    %v425 = vunpack.c.l.b16 %v122
    %v426 = vunpack.c.l.b16 %v123
    %v427 = vunpack.c.l.b16 %v124
    %v428 = vunpack.c.l.b16 %v125
    %v429 = vunpack.c.l.b16 %v126
    %v430 = vunpack.c.l.b16 %v127
    %v431 = vunpack.c.l.b16 %v128
    %v432 = vunpack.c.l.b16 %v129
    %v433 = vunpack.c.l.b16 %v130
    %v434 = vunpack.c.l.b16 %v131
    %v435 = vunpack.c.l.b16 %v132
    %v436 = vunpack.c.l.b16 %v133
    %v437 = vunpack.c.l.b16 %v134
    %v438 = vunpack.c.l.b16 %v135
    %v439 = vunpack.c.l.b16 %v136
    %v440 = vunpack.c.l.b16 %v137
    %v441 = vunpack.c.l.b16 %v138
    %v442 = vunpack.c.l.b16 %v139
    %v443 = vunpack.c.l.b16 %v140
    %v444 = vunpack.c.l.b16 %v141
    %v445 = vunpack.c.l.b16 %v142
    %v446 = vunpack.c.l.b16 %v143
    %v447 = vunpack.c.l.b16 %v144
    %v448 = vunpack.c.l.b16 %v145
    %v449 = vunpack.c.l.b16 %v146
    %v450 = vunpack.c.l.b16 %v147
    %v451 = vunpack.c.l.b16 %v148
    %v452 = vunpack.c.l.b16 %v149
    %v453 = vunpack.c.l.b16 %v150
    %v454 = vunpack.c.l.b16 %v151
    %v455 = vunpack.c.l.b16 %v152
    %v456 = vunpack.c.l.b16 %v153
    %v457 = vunpack.c.l.b16 %v154
    %v458 = vunpack.c.l.b16 %v155
    %v459 = vunpack.c.l.b16 %v156
    %v460 = vunpack.c.l.b16 %v157
    %v461 = vunpack.c.l.b16 %v158
    %v462 = vunpack.c.l.b16 %v159
    %v463 = vunpack.c.l.b16 %v160
    %v464 = vunpack.c.l.b16 %v161
    %v465 = vunpack.c.l.b16 %v162
    %v466 = vunpack.c.l.b16 %v163
    %v467 = vunpack.c.l.b16 %v164
    %v468 = vunpack.c.l.b16 %v165
    %v469 = vunpack.c.l.b16 %v166
    %v470 = vunpack.c.l.b16 %v167
    %v471 = vunpack.c.l.b16 %v168
    %v472 = vunpack.c.l.b16 %v169
    %v473 = vunpack.c.l.b16 %v170
    %v474 = vunpack.c.l.b16 %v171
    %v475 = vunpack.c.l.b16 %v172
    %v476 = vunpack.c.l.b16 %v173
    %v477 = vunpack.c.l.b16 %v174
    %v478 = vunpack.c.l.b16 %v175
    %v479 = vunpack.c.l.b16 %v176
    %v480 = vunpack.c.l.b16 %v177
    %v481 = vunpack.c.l.b16 %v178
    %v482 = vunpack.c.l.b16 %v179
    %v483 = vunpack.c.l.b16 %v180
    %v484 = vunpack.c.l.b16 %v181
    %v485 = vunpack.c.l.b16 %v182
    %v486 = vunpack.c.l.b16 %v183
    %v487 = vunpack.c.l.b16 %v184
    %v488 = vunpack.c.l.b16 %v185
    %v489 = vunpack.c.l.b16 %v186
    %v490 = vunpack.c.l.b16 %v187
    %v491 = vunpack.c.l.b16 %v188
    %v492 = vunpack.c.l.b16 %v189
    %v493 = vunpack.c.l.b16 %v190
    %v494 = vunpack.c.l.b16 %v191
    %v495 = vunpack.c.l.b16 %v192
    %v496 = vunpack.c.l.b16 %v193
    %v497 = vunpack.c.l.b16 %v194
    %v498 = vunpack.c.l.b16 %v195
    %v499 = vunpack.c.l.b16 %v196
    %v500 = vunpack.c.l.b16 %v197
    %v501 = vunpack.c.l.b16 %v198
    %v502 = vunpack.c.l.b16 %v199
    %v503 = vunpack.c.l.b16 %v200
    %v504 = vunpack.c.l.b16 %v201
    %v505 = vunpack.c.l.b16 %v202
    %v506 = vunpack.c.l.b16 %v203
    %v507 = vunpack.c.l.b16 %v204
    %v508 = vunpack.c.l.b16 %v205
    %v509 = vunpack.c.l.b16 %v206
    %v510 = vunpack.c.l.b16 %v207
    %v511 = vunpack.c.l.b16 %v208
    %v512 = vunpack.c.l.b16 %v209
    %v513 = vunpack.c.l.b16 %v210
    %v514 = vunpack.c.l.b16 %v211
    %v515 = vunpack.c.l.b16 %v212
    %v516 = vunpack.c.l.b16 %v213
    %v517 = vunpack.c.l.b16 %v214
    %v518 = vunpack.c.l.b16 %v215
    %v519 = vunpack.c.l.b16 %v216
    %v520 = vunpack.c.l.b16 %v217
    %v521 = vunpack.c.l.b16 %v218
    %v522 = vunpack.c.l.b16 %v219
    %v523 = vunpack.c.l.b16 %v220
    %v524 = vunpack.c.l.b16 %v221
    %v525 = vpack.c.b16 %v398, %v397
    %v526 = vpack.c.b16 %v400, %v399
    %v527 = vpack.c.b16 %v402, %v401
    %v528 = vpack.c.b16 %v404, %v403
    %v529 = vpack.c.b16 %v406, %v405
    %v530 = vpack.c.b16 %v408, %v407
    %v531 = vpack.c.b16 %v410, %v409
    %v532 = vpack.c.b16 %v412, %v411
    %v533 = vpack.c.b16 %v414, %v413
    %v534 = vpack.c.b16 %v416, %v415
    %v535 = vpack.c.b16 %v418, %v417
    %v536 = vpack.c.b16 %v420, %v419
    %v537 = vpack.c.b16 %v422, %v421
    %v538 = vpack.c.b16 %v424, %v423
    %v539 = vpack.c.b16 %v426, %v425
    %v540 = vpack.c.b16 %v428, %v427
    %v541 = vpack.c.b16 %v430, %v429
    %v542 = vpack.c.b16 %v432, %v431
    %v543 = vpack.c.b16 %v434, %v433
    %v544 = vpack.c.b16 %v436, %v435
    %v545 = vpack.c.b16 %v438, %v437
    %v546 = vpack.c.b16 %v440, %v439
    %v547 = vpack.c.b16 %v442, %v441
    %v548 = vpack.c.b16 %v444, %v443
    %v549 = vpack.c.b16 %v446, %v445
    %v550 = vpack.c.b16 %v448, %v447
    %v551 = vpack.c.b16 %v450, %v449
    %v552 = vpack.c.b16 %v452, %v451
    %v553 = vpack.c.b16 %v454, %v453
    %v554 = vpack.c.b16 %v456, %v455
    %v555 = vpack.c.b16 %v458, %v457
    %v556 = vpack.c.b16 %v460, %v459
    %v557 = vpack.c.b16 %v462, %v461
    %v558 = vpack.c.b16 %v464, %v463
    %v559 = vpack.c.b16 %v466, %v465
    %v560 = vpack.c.b16 %v468, %v467
    %v561 = vpack.c.b16 %v470, %v469
    %v562 = vpack.c.b16 %v472, %v471
    %v563 = vpack.c.b16 %v474, %v473
    %v564 = vpack.c.b16 %v476, %v475
    %v565 = vpack.c.b16 %v478, %v477
    %v566 = vpack.c.b16 %v480, %v479
    %v567 = vpack.c.b16 %v482, %v481
    %v568 = vpack.c.b16 %v484, %v483
    %v569 = vpack.c.b16 %v486, %v485
    %v570 = vpack.c.b16 %v488, %v487
    %v571 = vpack.c.b16 %v490, %v489
    %v572 = vpack.c.b16 %v492, %v491
    %v573 = vpack.c.b16 %v494, %v493
    %v574 = vpack.c.b16 %v496, %v495
    %v575 = vpack.c.b16 %v498, %v497
    %v576 = vpack.c.b16 %v500, %v499
    %v577 = vpack.c.b16 %v502, %v501
    %v578 = vpack.c.b16 %v504, %v503
    %v579 = vpack.c.b16 %v506, %v505
    %v580 = vpack.c.b16 %v508, %v507
    %v581 = vpack.c.b16 %v510, %v509
    %v582 = vpack.c.b16 %v512, %v511
    %v583 = vpack.c.b16 %v514, %v513
    %v584 = vpack.c.b16 %v516, %v515
    %v585 = vpack.c.b16 %v518, %v517
    %v586 = vpack.c.b16 %v520, %v519
    %v587 = vpack.c.b16 %v522, %v521
    %v588 = vpack.c.b16 %v524, %v523
    %653 = vmatprep.subr.bf16.mxu0 0
    %654 = vmatpush1.bf16.msra.mxu0 %v525
    %655 = vmatprep.subr.bf16.mxu0 0
    %656 = vmatpush1.bf16.msra.mxu0 %v526
    %657 = vmatprep.subr.bf16.mxu0 0
    %658 = vmatpush1.bf16.msra.mxu0 %v527
    %659 = vmatprep.subr.bf16.mxu0 0
    %660 = vmatpush1.bf16.msra.mxu0 %v528
    %661 = vmatprep.subr.bf16.mxu0 0
    %662 = vmatpush1.bf16.msra.mxu0 %v529
    %663 = vmatprep.subr.bf16.mxu0 0
    %664 = vmatpush1.bf16.msra.mxu0 %v530
    %665 = vmatprep.subr.bf16.mxu0 0
    %666 = vmatpush1.bf16.msra.mxu0 %v531
    %667 = vmatprep.subr.bf16.mxu0 0
    %668 = vmatpush1.bf16.msra.mxu0 %v532
    %669 = vmatprep.subr.bf16.mxu0 0
    %670 = vmatpush1.bf16.msra.mxu0 %v533
    %671 = vmatprep.subr.bf16.mxu0 0
    %672 = vmatpush1.bf16.msra.mxu0 %v534
    %673 = vmatprep.subr.bf16.mxu0 0
    %674 = vmatpush1.bf16.msra.mxu0 %v535
    %675 = vmatprep.subr.bf16.mxu0 0
    %676 = vmatpush1.bf16.msra.mxu0 %v536
    %677 = vmatprep.subr.bf16.mxu0 0
    %678 = vmatpush1.bf16.msra.mxu0 %v537
    %679 = vmatprep.subr.bf16.mxu0 0
    %680 = vmatpush1.bf16.msra.mxu0 %v538
    %681 = vmatprep.subr.bf16.mxu0 0
    %682 = vmatpush1.bf16.msra.mxu0 %v539
    %683 = vmatprep.subr.bf16.mxu0 0
    %684 = vmatpush1.bf16.msra.mxu0 %v540
    %685 = vmatprep.mubr.bf16.mxu0 %v254
    %686 = vmatmul.mubr.bf16.gmra.mrb[0].mxu0 %v253
    %v687 = vpop.f32.mrb[0].mxu0
    %v688 = vadd.f32 %v227, %v687
    %v689 = vpop.f32.mrb[0].mxu0
    %v690 = vpop.f32.mrb[0].mxu0
    %v691 = vadd.f32 %v227, %v690
    %v692 = vpop.f32.mrb[0].mxu0
    %693 = vdwg.mxu0
    %694 = vmatprep.subr.bf16.mxu0 0
    %695 = vmatpush1.bf16.msra.mxu0 %v541
    %696 = vmatprep.subr.bf16.mxu0 0
    %697 = vmatpush1.bf16.msra.mxu0 %v542
    %698 = vmatprep.subr.bf16.mxu0 0
    %699 = vmatpush1.bf16.msra.mxu0 %v543
    %700 = vmatprep.subr.bf16.mxu0 0
    %701 = vmatpush1.bf16.msra.mxu0 %v544
    %702 = vmatprep.subr.bf16.mxu0 0
    %703 = vmatpush1.bf16.msra.mxu0 %v545
    %704 = vmatprep.subr.bf16.mxu0 0
    %705 = vmatpush1.bf16.msra.mxu0 %v546
    %706 = vmatprep.subr.bf16.mxu0 0
    %707 = vmatpush1.bf16.msra.mxu0 %v547
    %708 = vmatprep.subr.bf16.mxu0 0
    %709 = vmatpush1.bf16.msra.mxu0 %v548
    %710 = vmatprep.subr.bf16.mxu0 0
    %711 = vmatpush1.bf16.msra.mxu0 %v549
    %712 = vmatprep.subr.bf16.mxu0 0
    %713 = vmatpush1.bf16.msra.mxu0 %v550
    %714 = vmatprep.subr.bf16.mxu0 0
    %715 = vmatpush1.bf16.msra.mxu0 %v551
    %716 = vmatprep.subr.bf16.mxu0 0
    %717 = vmatpush1.bf16.msra.mxu0 %v552
    %718 = vmatprep.subr.bf16.mxu0 0
    %719 = vmatpush1.bf16.msra.mxu0 %v553
    %720 = vmatprep.subr.bf16.mxu0 0
    %721 = vmatpush1.bf16.msra.mxu0 %v554
    %722 = vmatprep.subr.bf16.mxu0 0
    %723 = vmatpush1.bf16.msra.mxu0 %v555
    %724 = vmatprep.subr.bf16.mxu0 0
    %725 = vmatpush1.bf16.msra.mxu0 %v556
    %726 = vmatprep.mubr.bf16.mxu0 %v256
    %727 = vmatmul.mubr.bf16.gmra.mrb[0].mxu0 %v255
    %v728 = vpop.f32.mrb[0].mxu0
    %v729 = vadd.f32 %v688, %v728
    %v730 = vpop.f32.mrb[0].mxu0
    %v731 = vpop.f32.mrb[0].mxu0
    %v732 = vadd.f32 %v691, %v731
    %v733 = vpop.f32.mrb[0].mxu0
    %734 = vdwg.mxu0
    %735 = vmatprep.subr.bf16.mxu0 0
    %736 = vmatpush1.bf16.msra.mxu0 %v557
    %737 = vmatprep.subr.bf16.mxu0 0
    %738 = vmatpush1.bf16.msra.mxu0 %v558
    %739 = vmatprep.subr.bf16.mxu0 0
    %740 = vmatpush1.bf16.msra.mxu0 %v559
    %741 = vmatprep.subr.bf16.mxu0 0
    %742 = vmatpush1.bf16.msra.mxu0 %v560
    %743 = vmatprep.subr.bf16.mxu0 0
    %744 = vmatpush1.bf16.msra.mxu0 %v561
    %745 = vmatprep.subr.bf16.mxu0 0
    %746 = vmatpush1.bf16.msra.mxu0 %v562
    %747 = vmatprep.subr.bf16.mxu0 0
    %748 = vmatpush1.bf16.msra.mxu0 %v563
    %749 = vmatprep.subr.bf16.mxu0 0
    %750 = vmatpush1.bf16.msra.mxu0 %v564
    %751 = vmatprep.subr.bf16.mxu0 0
    %752 = vmatpush1.bf16.msra.mxu0 %v565
    %753 = vmatprep.subr.bf16.mxu0 0
    %754 = vmatpush1.bf16.msra.mxu0 %v566
    %755 = vmatprep.subr.bf16.mxu0 0
    %756 = vmatpush1.bf16.msra.mxu0 %v567
    %757 = vmatprep.subr.bf16.mxu0 0
    %758 = vmatpush1.bf16.msra.mxu0 %v568
    %759 = vmatprep.subr.bf16.mxu0 0
    %760 = vmatpush1.bf16.msra.mxu0 %v569
    %761 = vmatprep.subr.bf16.mxu0 0
    %762 = vmatpush1.bf16.msra.mxu0 %v570
    %763 = vmatprep.subr.bf16.mxu0 0
    %764 = vmatpush1.bf16.msra.mxu0 %v571
    %765 = vmatprep.subr.bf16.mxu0 0
    %766 = vmatpush1.bf16.msra.mxu0 %v572
    %767 = vmatprep.mubr.bf16.mxu0 %v258
    %768 = vmatmul.mubr.bf16.gmra.mrb[0].mxu0 %v257
    %v769 = vpop.f32.mrb[0].mxu0
    %v770 = vadd.f32 %v729, %v769
    %v771 = vpop.f32.mrb[0].mxu0
    %v772 = vpop.f32.mrb[0].mxu0
    %v773 = vadd.f32 %v732, %v772
    %v774 = vpop.f32.mrb[0].mxu0
    %775 = vdwg.mxu0
    %776 = vmatprep.subr.bf16.mxu0 0
    %777 = vmatpush1.bf16.msra.mxu0 %v573
    %778 = vmatprep.subr.bf16.mxu0 0
    %779 = vmatpush1.bf16.msra.mxu0 %v574
    %780 = vmatprep.subr.bf16.mxu0 0
    %781 = vmatpush1.bf16.msra.mxu0 %v575
    %782 = vmatprep.subr.bf16.mxu0 0
    %783 = vmatpush1.bf16.msra.mxu0 %v576
    %784 = vmatprep.subr.bf16.mxu0 0
    %785 = vmatpush1.bf16.msra.mxu0 %v577
    %786 = vmatprep.subr.bf16.mxu0 0
    %787 = vmatpush1.bf16.msra.mxu0 %v578
    %788 = vmatprep.subr.bf16.mxu0 0
    %789 = vmatpush1.bf16.msra.mxu0 %v579
    %790 = vmatprep.subr.bf16.mxu0 0
    %791 = vmatpush1.bf16.msra.mxu0 %v580
    %792 = vmatprep.subr.bf16.mxu0 0
    %793 = vmatpush1.bf16.msra.mxu0 %v581
    %794 = vmatprep.subr.bf16.mxu0 0
    %795 = vmatpush1.bf16.msra.mxu0 %v582
    %796 = vmatprep.subr.bf16.mxu0 0
    %797 = vmatpush1.bf16.msra.mxu0 %v583
    %798 = vmatprep.subr.bf16.mxu0 0
    %799 = vmatpush1.bf16.msra.mxu0 %v584
    %800 = vmatprep.subr.bf16.mxu0 0
    %801 = vmatpush1.bf16.msra.mxu0 %v585
    %802 = vmatprep.subr.bf16.mxu0 0
    %803 = vmatpush1.bf16.msra.mxu0 %v586
    %804 = vmatprep.subr.bf16.mxu0 0
    %805 = vmatpush1.bf16.msra.mxu0 %v587
    %806 = vmatprep.subr.bf16.mxu0 0
    %807 = vmatpush1.bf16.msra.mxu0 %v588
    %808 = vmatprep.mubr.bf16.mxu0 %v260
    %809 = vmatmul.mubr.bf16.gmra.mrb[0].mxu0 %v259
    %v810 = vpop.f32.mrb[0].mxu0
    %v811 = vadd.f32 %v770, %v810
    %v812 = vpop.f32.mrb[0].mxu0
    %v813 = vpop.f32.mrb[0].mxu0
    %v814 = vadd.f32 %v773, %v813
    %v815 = vpop.f32.mrb[0].mxu0
    %816 = vdwg.mxu0
    %v817 = vmax.f32 %v811, 0.0
    %v818 = vmax.f32 %v814, 0.0
    %v819 = vpack.c.bf16 %v818, %v817
    %v820 = vld [vmem:[#allocation7] sm:$0xff]
    %v821 = vld [vmem:[#allocation7 + $0x8] sm:$0xff]
    %v822 = vld [vmem:[#allocation7 + $0x10] sm:$0xff]
    %v823 = vld [vmem:[#allocation7 + $0x18] sm:$0xff]
    %v824 = vld [vmem:[#allocation7 + $0x20] sm:$0xff]
    %v825 = vld [vmem:[#allocation7 + $0x28] sm:$0xff]
    %v826 = vld [vmem:[#allocation7 + $0x30] sm:$0xff]
    %v827 = vld [vmem:[#allocation7 + $0x38] sm:$0xff]
    %v828 = vld [vmem:[#allocation7 + $0x40] sm:$0xff]
    %v829 = vld [vmem:[#allocation7 + $0x48] sm:$0xff]
    %v830 = vld [vmem:[#allocation7 + $0x50] sm:$0xff]
    %v831 = vld [vmem:[#allocation7 + $0x58] sm:$0xff]
    %v832 = vld [vmem:[#allocation7 + $0x60] sm:$0xff]
    %v833 = vld [vmem:[#allocation7 + $0x68] sm:$0xff]
    %v834 = vld [vmem:[#allocation7 + $0x70] sm:$0xff]
    %v835 = vld [vmem:[#allocation7 + $0x78] sm:$0xff]
    %v852 = vunpack.c.l.b16 %v820
    %v853 = vunpack.c.h.b16 %v820
    %v854 = vunpack.c.l.b16 %v821
    %v855 = vunpack.c.h.b16 %v821
    %v856 = vunpack.c.l.b16 %v822
    %v857 = vunpack.c.h.b16 %v822
    %v858 = vunpack.c.l.b16 %v823
    %v859 = vunpack.c.h.b16 %v823
    %v860 = vunpack.c.l.b16 %v824
    %v861 = vunpack.c.h.b16 %v824
    %v862 = vunpack.c.l.b16 %v825
    %v863 = vunpack.c.h.b16 %v825
    %v864 = vunpack.c.l.b16 %v826
    %v865 = vunpack.c.h.b16 %v826
    %v866 = vunpack.c.l.b16 %v827
    %v867 = vunpack.c.h.b16 %v827
    %v868 = vunpack.c.l.b16 %v828
    %v869 = vunpack.c.h.b16 %v828
    %v870 = vunpack.c.l.b16 %v829
    %v871 = vunpack.c.h.b16 %v829
    %v872 = vunpack.c.l.b16 %v830
    %v873 = vunpack.c.h.b16 %v830
    %v874 = vunpack.c.l.b16 %v831
    %v875 = vunpack.c.h.b16 %v831
    %v876 = vunpack.c.l.b16 %v832
    %v877 = vunpack.c.h.b16 %v832
    %v878 = vunpack.c.l.b16 %v833
    %v879 = vunpack.c.h.b16 %v833
    %v880 = vunpack.c.l.b16 %v834
    %v881 = vunpack.c.h.b16 %v834
    %v882 = vunpack.c.l.b16 %v835
    %v883 = vunpack.c.h.b16 %v835
    %v884 = vpack.c.b16 %v854, %v852
    %v885 = vpack.c.b16 %v855, %v853
    %v886 = vpack.c.b16 %v858, %v856
    %v887 = vpack.c.b16 %v859, %v857
    %v888 = vpack.c.b16 %v862, %v860
    %v889 = vpack.c.b16 %v863, %v861
    %v890 = vpack.c.b16 %v866, %v864
    %v891 = vpack.c.b16 %v867, %v865
    %v892 = vpack.c.b16 %v870, %v868
    %v893 = vpack.c.b16 %v871, %v869
    %v894 = vpack.c.b16 %v874, %v872
    %v895 = vpack.c.b16 %v875, %v873
    %v896 = vpack.c.b16 %v878, %v876
    %v897 = vpack.c.b16 %v879, %v877
    %v898 = vpack.c.b16 %v882, %v880
    %v899 = vpack.c.b16 %v883, %v881
    %916 = vmatprep.subr.bf16.mxu0 %v885
    %917 = vmatpush1.bf16.msra.mxu0 %v884
    %918 = vmatprep.subr.bf16.mxu0 %v887
    %919 = vmatpush1.bf16.msra.mxu0 %v886
    %920 = vmatprep.subr.bf16.mxu0 %v889
    %921 = vmatpush1.bf16.msra.mxu0 %v888
    %922 = vmatprep.subr.bf16.mxu0 %v891
    %923 = vmatpush1.bf16.msra.mxu0 %v890
    %924 = vmatprep.subr.bf16.mxu0 %v893
    %925 = vmatpush1.bf16.msra.mxu0 %v892
    %926 = vmatprep.subr.bf16.mxu0 %v895
    %927 = vmatpush1.bf16.msra.mxu0 %v894
    %928 = vmatprep.subr.bf16.mxu0 %v897
    %929 = vmatpush1.bf16.msra.mxu0 %v896
    %930 = vmatprep.subr.bf16.mxu0 %v899
    %931 = vmatpush1.bf16.msra.mxu0 %v898
    %932 = vmatprep.subr.bf16.mxu0 0
    %933 = vmatpush1.bf16.msra.mxu0 0
    %934 = vmatprep.subr.bf16.mxu0 0
    %935 = vmatpush1.bf16.msra.mxu0 0
    %936 = vmatprep.subr.bf16.mxu0 0
    %937 = vmatpush1.bf16.msra.mxu0 0
    %938 = vmatprep.subr.bf16.mxu0 0
    %939 = vmatpush1.bf16.msra.mxu0 0
    %940 = vmatprep.subr.bf16.mxu0 0
    %941 = vmatpush1.bf16.msra.mxu0 0
    %942 = vmatprep.subr.bf16.mxu0 0
    %943 = vmatpush1.bf16.msra.mxu0 0
    %944 = vmatprep.subr.bf16.mxu0 0
    %945 = vmatpush1.bf16.msra.mxu0 0
    %946 = vmatprep.subr.bf16.mxu0 0
    %947 = vmatpush1.bf16.msra.mxu0 0
    %948 = vmatprep.mubr.bf16.mxu0 0
    %949 = vmatmul.mubr.bf16.gmra.mrb[0].mxu0 %v819
    %v950 = vpop.f32.mrb[0].mxu0
    %v951 = vadd.f32 0.0, %v950
    %v952 = vpop.f32.mrb[0].mxu0
    %v953 = vadd.f32 0.0, %v952
    %v954 = vpop.f32.mrb[0].mxu0
    %v955 = vadd.f32 0.0, %v954
    %v956 = vpop.f32.mrb[0].mxu0
    %v957 = vadd.f32 0.0, %v956
    %958 = vdwg.mxu0
    %v959 = vlaneseq
    %v960 = vshrl.u32 %v959, 7
    %v961 = vadd.s32 %v960, 8
    %vm962 = vcmp.lt.s32.totalorder %v960, 8
    %vm963 = vcmp.lt.s32.totalorder %v961, 8
    %v964 = vsel %vm962, 1, 0
    %v965 = vsel %vm963, 1, 0
    %v966 = vcvt.s32.f32 %v964
    %v967 = vcvt.s32.f32 %v965
    %v968 = vmul.f32 %v951, %v966
    %v969 = vmul.f32 %v953, %v966
    %v970 = vmul.f32 %v955, %v967
    %v971 = vmul.f32 %v957, %v967
    %v972 = vadd.f32 %v968, %v970
    %v973 = vrot.slane %v972, 4
    %v974 = vadd.f32 %v972, %v973
    %v975 = vrot.slane %v974, 2
    %v976 = vadd.f32 %v974, %v975
    %v977 = vrot.slane %v976, 1
    %v978 = vadd.f32 %v976, %v977
    %v979 = vadd.f32 %v969, %v971
    %v980 = vrot.slane %v979, 4
    %v981 = vadd.f32 %v979, %v980
    %v982 = vrot.slane %v981, 2
    %v983 = vadd.f32 %v981, %v982
    %v984 = vrot.slane %v983, 1
    %v985 = vadd.f32 %v983, %v984
    %v986 = vmul.f32 %v978, 0.125
    %v987 = vmul.f32 %v985, 0.125
    %v988 = vmul.f32 %v968, %v951
    %v989 = vmul.f32 %v969, %v953
    %v990 = vmul.f32 %v970, %v955
    %v991 = vmul.f32 %v971, %v957
    %v992 = vadd.f32 %v988, %v990
    %v993 = vrot.slane %v992, 4
    %v994 = vadd.f32 %v992, %v993
    %v995 = vrot.slane %v994, 2
    %v996 = vadd.f32 %v994, %v995
    %v997 = vrot.slane %v996, 1
    %v998 = vadd.f32 %v996, %v997
    %v999 = vadd.f32 %v989, %v991
    %v1000 = vrot.slane %v999, 4
    %v1001 = vadd.f32 %v999, %v1000
    %v1002 = vrot.slane %v1001, 2
    %v1003 = vadd.f32 %v1001, %v1002
    %v1004 = vrot.slane %v1003, 1
    %v1005 = vadd.f32 %v1003, %v1004
    %v1006 = vmul.f32 %v998, 0.125
    %v1007 = vmul.f32 %v1005, 0.125
    %v1008 = vmul.f32 %v986, %v986
    %v1009 = vmul.f32 %v987, %v987
    %v1010 = vsub.f32 %v1006, %v1008
    %v1011 = vsub.f32 %v1007, %v1009
    %v1012 = vmax.f32 %v1010, 0.0
    %v1013 = vmax.f32 %v1011, 0.0
    %v1014 = vld [vmem:[%s4] sm:$0x3]
    %v1015 = vadd.f32 %v1012, 1e-05
    %v1016 = vadd.f32 %v1013, 1e-05
    %v1017 = vrsqrt.pop %v1015
    %v1018 = vrsqrt.pop %v1016
    %v1021 = vcombine.low %v1017, %v1018
    %v1023 = vunpack.c.l.s4 1966171168
    %v1024 = vunpack.c.0.s8 %v1023
    %v1025 = vlaneseq
    %v1026 = vshrl.u32 %v1025, 7
    %v1027 = vsub.s32 %v1024, %v1026
    %v1028 = vrot.slane %v1021, %v1027
    %v1030 = vunpack.c.l.s4 1966171168
    %v1031 = vunpack.c.0.s8 %v1030
    %v1032 = vlaneseq
    %v1033 = vshrl.u32 %v1032, 7
    %v1034 = vsub.s32 %v1031, %v1033
    %v1035 = vrot.slane %v1028, %v1034
    %v1037 = vmul.f32 %v1014, %v1035
    %v1038 = vld [vmem:[%s5] sm:$0x3]
    %v1040 = vlaneseq
    %v1041 = vshrl.u32 %v1040, 7
    %v1042 = vsub.s32 0, %v1041
    %v1043 = vrot.slane %v1037, %v1042
    %v1044 = vlaneseq
    %v1045 = vshrl.u32 %v1044, 7
    %v1046 = vsub.s32 1, %v1045
    %v1047 = vrot.slane %v1037, %v1046
    %v1050 = vmul.f32 %v986, %v1043
    %v1051 = vmul.f32 %v987, %v1047
    %v1054 = vcombine.low %v1050, %v1051
    %v1056 = vunpack.c.l.s4 1966171168
    %v1057 = vunpack.c.0.s8 %v1056
    %v1058 = vlaneseq
    %v1059 = vshrl.u32 %v1058, 7
    %v1060 = vsub.s32 %v1057, %v1059
    %v1061 = vrot.slane %v1054, %v1060
    %v1063 = vunpack.c.l.s4 1966171168
    %v1064 = vunpack.c.0.s8 %v1063
    %v1065 = vlaneseq
    %v1066 = vshrl.u32 %v1065, 7
    %v1067 = vsub.s32 %v1064, %v1066
    %v1068 = vrot.slane %v1061, %v1067
    %v1070 = vsub.f32 %v1038, %v1068
    %v1071 = vmul.f32 %v951, %v1043
    %v1072 = vmul.f32 %v953, %v1047
    %v1073 = vmul.f32 %v955, %v1043
    %v1074 = vmul.f32 %v957, %v1047
    %v1076 = vlaneseq
    %v1077 = vshrl.u32 %v1076, 7
    %v1078 = vsub.s32 0, %v1077
    %v1079 = vrot.slane %v1070, %v1078
    %v1080 = vlaneseq
    %v1081 = vshrl.u32 %v1080, 7
    %v1082 = vsub.s32 1, %v1081
    %v1083 = vrot.slane %v1070, %v1082
    %v1086 = vadd.f32 %v1071, %v1079
    %v1087 = vadd.f32 %v1072, %v1083
    %v1088 = vadd.f32 %v1073, %v1079
    %v1089 = vadd.f32 %v1074, %v1083
    %vm1090 = vcmp.ge.f32.partialorder %v1086, 0.0
    %vm1091 = vcmp.ge.f32.partialorder %v1087, 0.0
    %vm1092 = vcmp.ge.f32.partialorder %v1088, 0.0
    %vm1093 = vcmp.ge.f32.partialorder %v1089, 0.0
    %v1094 = vmul.f32 %v1086, 0.01
    %v1095 = vmul.f32 %v1087, 0.01
    %v1096 = vmul.f32 %v1088, 0.01
    %v1097 = vmul.f32 %v1089, 0.01
    %v1098 = vsel %vm1090, %v1086, %v1094
    %v1099 = vsel %vm1091, %v1087, %v1095
    %v1100 = vsel %vm1092, %v1088, %v1096
    %v1101 = vsel %vm1093, %v1089, %v1097
    %v1102 = vpack.c.bf16 %v1100, %v1098
    %v1103 = vpack.c.bf16 %v1101, %v1099
    %v1104 = vld [vmem:[#allocation8] sm:$0xf]
    %v1105 = vld [vmem:[#allocation8 + $0x4] sm:$0xf]
    %v1106 = vld [vmem:[#allocation8 + $0x8] sm:$0xf]
    %v1107 = vld [vmem:[#allocation8 + $0xc] sm:$0xf]
    %v1108 = vld [vmem:[#allocation8 + $0x10] sm:$0xf]
    %v1109 = vld [vmem:[#allocation8 + $0x14] sm:$0xf]
    %v1110 = vld [vmem:[#allocation8 + $0x18] sm:$0xf]
    %v1111 = vld [vmem:[#allocation8 + $0x1c] sm:$0xf]
    %v1112 = vld [vmem:[#allocation8 + $0x20] sm:$0xf]
    %v1113 = vld [vmem:[#allocation8 + $0x24] sm:$0xf]
    %v1114 = vld [vmem:[#allocation8 + $0x28] sm:$0xf]
    %v1115 = vld [vmem:[#allocation8 + $0x2c] sm:$0xf]
    %v1116 = vld [vmem:[#allocation8 + $0x30] sm:$0xf]
    %v1117 = vld [vmem:[#allocation8 + $0x34] sm:$0xf]
    %v1118 = vld [vmem:[#allocation8 + $0x38] sm:$0xf]
    %v1119 = vld [vmem:[#allocation8 + $0x3c] sm:$0xf]
    %v1120 = vld [vmem:[#allocation8 + $0x40] sm:$0xf]
    %v1121 = vld [vmem:[#allocation8 + $0x44] sm:$0xf]
    %v1122 = vld [vmem:[#allocation8 + $0x48] sm:$0xf]
    %v1123 = vld [vmem:[#allocation8 + $0x4c] sm:$0xf]
    %v1124 = vld [vmem:[#allocation8 + $0x50] sm:$0xf]
    %v1125 = vld [vmem:[#allocation8 + $0x54] sm:$0xf]
    %v1126 = vld [vmem:[#allocation8 + $0x58] sm:$0xf]
    %v1127 = vld [vmem:[#allocation8 + $0x5c] sm:$0xf]
    %v1128 = vld [vmem:[#allocation8 + $0x60] sm:$0xf]
    %v1129 = vld [vmem:[#allocation8 + $0x64] sm:$0xf]
    %v1130 = vld [vmem:[#allocation8 + $0x68] sm:$0xf]
    %v1131 = vld [vmem:[#allocation8 + $0x6c] sm:$0xf]
    %v1132 = vld [vmem:[#allocation8 + $0x70] sm:$0xf]
    %v1133 = vld [vmem:[#allocation8 + $0x74] sm:$0xf]
    %v1134 = vld [vmem:[#allocation8 + $0x78] sm:$0xf]
    %v1135 = vld [vmem:[#allocation8 + $0x7c] sm:$0xf]
    %v1136 = vld [vmem:[%s7] sm:$0x1]
    %v1138 = vlaneseq
    %v1139 = vshrl.u32 %v1138, 7
    %v1140 = vsub.s32 0, %v1139
    %v1141 = vrot.slane %v1136, %v1140
    %v1175 = vunpack.c.l.b16 %v1104
    %v1176 = vunpack.c.l.b16 %v1105
    %v1177 = vunpack.c.l.b16 %v1106
    %v1178 = vunpack.c.l.b16 %v1107
    %v1179 = vunpack.c.l.b16 %v1108
    %v1180 = vunpack.c.l.b16 %v1109
    %v1181 = vunpack.c.l.b16 %v1110
    %v1182 = vunpack.c.l.b16 %v1111
    %v1183 = vunpack.c.l.b16 %v1112
    %v1184 = vunpack.c.l.b16 %v1113
    %v1185 = vunpack.c.l.b16 %v1114
    %v1186 = vunpack.c.l.b16 %v1115
    %v1187 = vunpack.c.l.b16 %v1116
    %v1188 = vunpack.c.l.b16 %v1117
    %v1189 = vunpack.c.l.b16 %v1118
    %v1190 = vunpack.c.l.b16 %v1119
    %v1191 = vunpack.c.l.b16 %v1120
    %v1192 = vunpack.c.l.b16 %v1121
    %v1193 = vunpack.c.l.b16 %v1122
    %v1194 = vunpack.c.l.b16 %v1123
    %v1195 = vunpack.c.l.b16 %v1124
    %v1196 = vunpack.c.l.b16 %v1125
    %v1197 = vunpack.c.l.b16 %v1126
    %v1198 = vunpack.c.l.b16 %v1127
    %v1199 = vunpack.c.l.b16 %v1128
    %v1200 = vunpack.c.l.b16 %v1129
    %v1201 = vunpack.c.l.b16 %v1130
    %v1202 = vunpack.c.l.b16 %v1131
    %v1203 = vunpack.c.l.b16 %v1132
    %v1204 = vunpack.c.l.b16 %v1133
    %v1205 = vunpack.c.l.b16 %v1134
    %v1206 = vunpack.c.l.b16 %v1135
    %v1207 = vpack.c.b16 %v1176, %v1175
    %v1208 = vpack.c.b16 %v1178, %v1177
    %v1209 = vpack.c.b16 %v1180, %v1179
    %v1210 = vpack.c.b16 %v1182, %v1181
    %v1211 = vpack.c.b16 %v1184, %v1183
    %v1212 = vpack.c.b16 %v1186, %v1185
    %v1213 = vpack.c.b16 %v1188, %v1187
    %v1214 = vpack.c.b16 %v1190, %v1189
    %v1215 = vpack.c.b16 %v1192, %v1191
    %v1216 = vpack.c.b16 %v1194, %v1193
    %v1217 = vpack.c.b16 %v1196, %v1195
    %v1218 = vpack.c.b16 %v1198, %v1197
    %v1219 = vpack.c.b16 %v1200, %v1199
    %v1220 = vpack.c.b16 %v1202, %v1201
    %v1221 = vpack.c.b16 %v1204, %v1203
    %v1222 = vpack.c.b16 %v1206, %v1205
    %1239 = vmatprep.subr.bf16.mxu0 0
    %1240 = vmatpush1.bf16.msra.mxu0 %v1207
    %1241 = vmatprep.subr.bf16.mxu0 0
    %1242 = vmatpush1.bf16.msra.mxu0 %v1208
    %1243 = vmatprep.subr.bf16.mxu0 0
    %1244 = vmatpush1.bf16.msra.mxu0 %v1209
    %1245 = vmatprep.subr.bf16.mxu0 0
    %1246 = vmatpush1.bf16.msra.mxu0 %v1210
    %1247 = vmatprep.subr.bf16.mxu0 0
    %1248 = vmatpush1.bf16.msra.mxu0 %v1211
    %1249 = vmatprep.subr.bf16.mxu0 0
    %1250 = vmatpush1.bf16.msra.mxu0 %v1212
    %1251 = vmatprep.subr.bf16.mxu0 0
    %1252 = vmatpush1.bf16.msra.mxu0 %v1213
    %1253 = vmatprep.subr.bf16.mxu0 0
    %1254 = vmatpush1.bf16.msra.mxu0 %v1214
    %1255 = vmatprep.subr.bf16.mxu0 0
    %1256 = vmatpush1.bf16.msra.mxu0 %v1215
    %1257 = vmatprep.subr.bf16.mxu0 0
    %1258 = vmatpush1.bf16.msra.mxu0 %v1216
    %1259 = vmatprep.subr.bf16.mxu0 0
    %1260 = vmatpush1.bf16.msra.mxu0 %v1217
    %1261 = vmatprep.subr.bf16.mxu0 0
    %1262 = vmatpush1.bf16.msra.mxu0 %v1218
    %1263 = vmatprep.subr.bf16.mxu0 0
    %1264 = vmatpush1.bf16.msra.mxu0 %v1219
    %1265 = vmatprep.subr.bf16.mxu0 0
    %1266 = vmatpush1.bf16.msra.mxu0 %v1220
    %1267 = vmatprep.subr.bf16.mxu0 0
    %1268 = vmatpush1.bf16.msra.mxu0 %v1221
    %1269 = vmatprep.subr.bf16.mxu0 0
    %1270 = vmatpush1.bf16.msra.mxu0 %v1222
    %1271 = vmatprep.mubr.bf16.mxu0 %v1103
    %1272 = vmatmul.mubr.bf16.gmra.mrb[0].mxu0 %v1102
    %v1273 = vpop.f32.mrb[0].mxu0
    %v1274 = vadd.f32 %v1141, %v1273
    %v1275 = vpop.f32.mrb[0].mxu0
    %v1276 = vpop.f32.mrb[0].mxu0
    %v1277 = vadd.f32 %v1141, %v1276
    %v1278 = vpop.f32.mrb[0].mxu0
    %1279 = vdwg.mxu0
    %1280 = vst [vmem:[#allocation10] sm:$0xff] %v1274
    %1281 = vst [vmem:[#allocation10 + $0x8] sm:$0xff] %v1277
    // Predicated region
    $region50: #{tpu_custom_call.1} parent=1 // pred_check
      _
    $region51: #{tpu_custom_call.1} parent=1 // pred_check_branch
      %1283 = sbr.rel (0) target = $region53
    $region52: #{tpu_custom_call.1} parent=1 // pred_region
      %s1285 = ssub.s32 256, 256
      %1286 = vsyncadd [#allocation4], %s1285
      %s1287 = sshll.u32 [#allocation10], 4
      %s1288 = int_to_ptr.vmem [resolvable:$true] %s1287
      %1293 = dma.vmem_to_hbm [thread:$0]  %s1288, 256, %s8, [#allocation4], 128, 128, 8
    $region53: #{tpu_custom_call.1} parent=1 // pred_fallthru
      _
    // Predicated region
    $region54: #{tpu_custom_call.1} parent=1 // pred_check
      _
    $region55: #{tpu_custom_call.1} parent=1 // pred_check_branch
      %1295 = sbr.rel (0) target = $region57
    $region56: #{tpu_custom_call.1} parent=1 // pred_region
      %1296 = dma.done [#allocation4], 256
    $region57: #{tpu_custom_call.1} parent=1 // pred_fallthru
      _
    %1297 = vsyncpa [#allocation3], 1
    %1298 = vsyncpa [#allocation6], 1
    %1299 = vsyncpa [#allocation9], 1
    %1300 = vsyncpa [#allocation4], 1

</llo_original>
